<compile_context>
chip_gen: v7x
topology: tpu7x:2x2x1
jax: 0.10.0
libtpu: 0.0.40
codegen_flags: <defaults>
</compile_context>

<pallas_src>
import functools

import jax
import jax.numpy as jnp
import numpy as np
from jax import lax
from jax.experimental import pallas as pl
from jax.experimental.pallas import tpu as pltpu

_LANES = 128
_TARGET_BLOCK_BYTES = 2 * 1024 * 1024   # per-input block; x2 inputs x2 buffers = <=8 MiB
_ACC_ROWS = 8                           # accumulator tile rows per split (rows 0..3 used)


def _bbce_partial_kernel(x_ref, y_ref, o_ref, *, n_rows, ignore_value,
                         chunks_per_split, block_rows, ragged):
    """Accumulate per-lane partial sums for the balanced-BCE loss."""
    c = pl.program_id(0)     # TensorCore split ("parallel", v7x megacore)
    i = pl.program_id(1)     # reduction chunk within the split ("arbitrary")

    @pl.when(i == 0)
    def _init():
        o_ref[...] = jnp.zeros_like(o_ref)

    x = x_ref[...].astype(jnp.float32)   # in-kernel upcast: narrow inputs stay
    y = y_ref[...].astype(jnp.float32)   # narrow on the HBM read path

    # Padded tail lanes carry the ignore value, so the label test alone masks
    # them.  Only a ragged last grid block (rows % block_rows != 0) needs an
    # extra sublane-index mask to drop its out-of-range garbage rows.
    valid = y != ignore_value
    if ragged:
        g = c * chunks_per_split + i
        row = lax.broadcasted_iota(jnp.int32, x.shape, 0)
        valid = valid & (row < (n_rows - g * block_rows))

    vf = valid.astype(jnp.float32)
    xm = jnp.where(valid, x, 0.0)
    ym = jnp.where(valid, y, 0.0)

    # softplus(-x) = -log(sigmoid(x)), numerically stable.
    sp_neg = jnp.maximum(-xm, 0.0) + jnp.log1p(jnp.exp(-jnp.abs(xm)))
    t_pos = ym * sp_neg                  # y * -log(sigmoid(x))
    t_neg = (vf - ym) * (xm + sp_neg)    # (1-y) * -log(1-sigmoid(x)), valid only

    # Row-axis (sublane) folds keep lanes dense.
    o_ref[0:1, :] += jnp.sum(vf, axis=0, keepdims=True)
    o_ref[1:2, :] += jnp.sum(ym, axis=0, keepdims=True)
    o_ref[2:3, :] += jnp.sum(t_pos, axis=0, keepdims=True)
    o_ref[3:4, :] += jnp.sum(t_neg, axis=0, keepdims=True)


@functools.partial(jax.jit,
                   static_argnames=("pos_weight", "ignore_index", "reduction",
                                    "_block_rows_override"))
def balanced_bce_loss(output, label, *, pos_weight=None, ignore_index=255,
                      reduction="mean", _block_rows_override=None):
    assert output.shape == label.shape, (output.shape, label.shape)
    if reduction not in ("mean", "sum"):
        # TODO(synk): reduction='none' returns a masked_select-shaped (data
        # dependent length) vector; no static-shape Pallas equivalent.
        raise NotImplementedError("reduction must be 'mean' or 'sum'")

    n = int(np.prod(output.shape))
    xf = output.reshape(-1)
    yf = label.reshape(-1)

    # Pad only the <128-element tail (no-op in the common lane-aligned case).
    # Labels are padded with the ignore value so no extra in-kernel lane mask
    # is needed.
    pad = (-n) % _LANES
    if pad:
        xf = jnp.pad(xf, (0, pad))
        yf = jnp.pad(yf, (0, pad), constant_values=float(ignore_index))
    rows = (n + pad) // _LANES

    # Dtype-adaptive block: ~2 MiB of the widest input per block, multiple of 8.
    itemsize = max(jnp.dtype(output.dtype).itemsize,
                   jnp.dtype(label.dtype).itemsize)
    if _block_rows_override is not None:
        max_block_rows = int(_block_rows_override)
    else:
        max_block_rows = _TARGET_BLOCK_BYTES // (itemsize * _LANES)
        max_block_rows = max(8, (max_block_rows // 8) * 8)
    block_rows = min(max_block_rows, rows)

    total_chunks = pl.cdiv(rows, block_rows)
    ragged = (rows % block_rows) != 0
    # v7x: split the reduction across the two TensorCores when it divides
    # evenly (keeps every (c, i) grid point mapped to an in-range block).
    num_splits = 2 if (total_chunks >= 2 and total_chunks % 2 == 0) else 1
    chunks_per_split = total_chunks // num_splits

    x2 = xf.reshape(rows, _LANES)
    y2 = yf.reshape(rows, _LANES)

    kernel = functools.partial(
        _bbce_partial_kernel, n_rows=rows, ignore_value=float(ignore_index),
        chunks_per_split=chunks_per_split, block_rows=block_rows, ragged=ragged)

    partials = pl.pallas_call(
        kernel,
        out_shape=jax.ShapeDtypeStruct((num_splits * _ACC_ROWS, _LANES),
                                       jnp.float32),
        grid=(num_splits, chunks_per_split),
        in_specs=[
            pl.BlockSpec((block_rows, _LANES),
                         lambda c, i: (c * chunks_per_split + i, 0)),
            pl.BlockSpec((block_rows, _LANES),
                         lambda c, i: (c * chunks_per_split + i, 0)),
        ],
        out_specs=pl.BlockSpec((_ACC_ROWS, _LANES), lambda c, i: (c, 0)),
        compiler_params=pltpu.CompilerParams(
            dimension_semantics=("parallel", "arbitrary"),
            vmem_limit_bytes=32 * 1024 * 1024),
    )(x2, y2)

    # Tiny scalar epilogue in plain JAX.
    partials = partials.reshape(num_splits, _ACC_ROWS, _LANES)
    sums = jnp.sum(partials[:, :4, :], axis=(0, 2))       # (4,)
    count, sum_pos, s_pos, s_neg = sums[0], sums[1], sums[2], sums[3]

    if pos_weight is None:
        w = (count - sum_pos) / count      # fraction of negative valid labels
    else:
        w = jnp.float32(pos_weight)
    # Algebraic simplification of BCEWithLogits(pos_weight=w/(1-w)) / factor
    # with factor = 1/(1-w); also yields exactly 0 when w == 1 ("return 0").
    loss_sum = w * s_pos + (1.0 - w) * s_neg
    if reduction == "mean":
        return loss_sum / count
    return loss_sum


class BalancedBinaryCrossEntropyLoss:
    """JAX/Pallas port of the PyTorch BalancedBinaryCrossEntropyLoss module."""

    def __init__(self, pos_weight=None, ignore_index=255):
        self.pos_weight = pos_weight
        self.ignore_index = ignore_index

    def forward(self, output, label, reduction="mean"):
        return balanced_bce_loss(output, label, pos_weight=self.pos_weight,
                                 ignore_index=self.ignore_index,
                                 reduction=reduction)

    __call__ = forward


def _ref_balanced_bce(output, label, pos_weight=None, ignore_index=255,
                      reduction="mean"):
    """NumPy float64 re-implementation of the PyTorch reference."""
    x = np.asarray(output, dtype=np.float64).ravel()
    y = np.asarray(label, dtype=np.float64).ravel()
    m = y != float(ignore_index)
    x, y = x[m], y[m]
    if pos_weight is None:
        w = np.sum(1.0 - y) / y.size
        if w == 1.0:
            return 0.0
    else:
        w = float(pos_weight)
    factor = 1.0 / (1.0 - w)
    p = w * factor
    sp_neg = np.maximum(-x, 0.0) + np.log1p(np.exp(-np.abs(x)))  # -log sigmoid
    sp_pos = x + sp_neg                                          # -log(1-sig)
    per_elem = p * y * sp_neg + (1.0 - y) * sp_pos
    loss = per_elem.mean() if reduction == "mean" else per_elem.sum()
    return loss / factor


if __name__ == "__main__":
    key = jax.random.PRNGKey(0)
    k_logit, k_lab, k_ign = jax.random.split(key, 3)

    shape = (2, 1, 16, 16)                       # NCHW binary-seg logits
    logits = jax.random.normal(k_logit, shape, jnp.float32) * 2.0
    lab01 = jax.random.bernoulli(k_lab, 0.35, shape).astype(jnp.float32)
    ign = jax.random.bernoulli(k_ign, 0.10, shape)
    label = jnp.where(ign, jnp.float32(255.0), lab01)

    # Default path: pos_weight=None (balanced weight from the data), mean.
    crit = BalancedBinaryCrossEntropyLoss()
    loss = jax.block_until_ready(crit(logits, label))
    ref = _ref_balanced_bce(np.asarray(logits), np.asarray(label))
    assert np.allclose(float(loss), ref, rtol=1e-5, atol=1e-6), (float(loss), ref)

    # Fixed pos_weight path.
    crit_pw = BalancedBinaryCrossEntropyLoss(pos_weight=0.4)
    loss_pw = jax.block_until_ready(crit_pw(logits, label))
    ref_pw = _ref_balanced_bce(np.asarray(logits), np.asarray(label),
                               pos_weight=0.4)
    assert np.allclose(float(loss_pw), ref_pw, rtol=1e-5, atol=1e-6), \
        (float(loss_pw), ref_pw)

    # bf16 logits: upcast happens inside the kernel (half the HBM read bytes).
    logits_bf16 = logits.astype(jnp.bfloat16)
    loss_bf = jax.block_until_ready(crit(logits_bf16, label))
    ref_bf = _ref_balanced_bce(
        np.asarray(logits_bf16.astype(jnp.float32)), np.asarray(label))
    assert np.allclose(float(loss_bf), ref_bf, rtol=1e-4, atol=1e-5), \
        (float(loss_bf), ref_bf)

    # Exercise the multi-chunk / megacore-split / ragged-last-block path with a
    # small block override (rows=60, block=16 -> 4 chunks, 2 splits, ragged).
    shape2 = (3, 1, 40, 64)
    k2a, k2b, k2c = jax.random.split(jax.random.PRNGKey(1), 3)
    logits2 = jax.random.normal(k2a, shape2, jnp.float32) * 1.5
    lab2 = jax.random.bernoulli(k2b, 0.25, shape2).astype(jnp.float32)
    ign2 = jax.random.bernoulli(k2c, 0.15, shape2)
    label2 = jnp.where(ign2, jnp.float32(255.0), lab2)
    loss2 = jax.block_until_ready(
        balanced_bce_loss(logits2, label2, _block_rows_override=16))
    ref2 = _ref_balanced_bce(np.asarray(logits2), np.asarray(label2))
    assert np.allclose(float(loss2), ref2, rtol=1e-5, atol=1e-6), \
        (float(loss2), ref2)

    print("KERNEL_OK")
</pallas_src>

<mosaic_0001>
module attributes {stable_mosaic.version = 11 : i64} {
  func.func @_bbce_partial_kernel(%arg0: i32, %arg1: i32, %arg2: memref<4x128xf32, #tpu.memory_space<vmem>>, %arg3: memref<4x128xf32, #tpu.memory_space<vmem>>, %arg4: memref<8x128xf32, #tpu.memory_space<vmem>>) attributes {dimension_semantics = [#tpu.dimension_semantics<parallel>, #tpu.dimension_semantics<arbitrary>], iteration_bounds = array<i64: 1, 1>, scalar_prefetch = 0 : i64, scratch_operands = 0 : i64, tpu.core_type = #tpu.core_type<tc>, window_params = [{transform_indices = @transform_0, window_bounds = array<i64: 4, 128>}, {transform_indices = @transform_1, window_bounds = array<i64: 4, 128>}, {transform_indices = @transform_2, window_bounds = array<i64: 8, 128>}]} {
    %c0_i32 = arith.constant 0 : i32
    %0 = arith.cmpi eq, %arg1, %c0_i32 : i32
    %1 = arith.extui %0 : i1 to i32
    %c0_i32_0 = arith.constant 0 : i32
    %2 = arith.cmpi ne, %1, %c0_i32_0 : i32
    scf.if %2 {
      %cst_26 = arith.constant 0.000000e+00 : f32
      %47 = vector.broadcast %cst_26 : f32 to vector<8x128xf32>
      %c0_27 = arith.constant 0 : index
      %c0_28 = arith.constant 0 : index
      %48 = vector.load %arg4[%c0_27, %c0_28] : memref<8x128xf32, #tpu.memory_space<vmem>>, vector<8x128xf32>
      tpu.vector_store %arg4[%c0_27, %c0_28], %47 {strides = array<i32>} : memref<8x128xf32, #tpu.memory_space<vmem>>, vector<8x128xf32>,
    } else {
    }
    %c0 = arith.constant 0 : index
    %c0_1 = arith.constant 0 : index
    %3 = vector.load %arg2[%c0, %c0_1] : memref<4x128xf32, #tpu.memory_space<vmem>>, vector<4x128xf32>
    %c0_2 = arith.constant 0 : index
    %c0_3 = arith.constant 0 : index
    %4 = vector.load %arg3[%c0_2, %c0_3] : memref<4x128xf32, #tpu.memory_space<vmem>>, vector<4x128xf32>
    %cst = arith.constant 2.550000e+02 : f32
    %5 = vector.broadcast %cst : f32 to vector<4x128xf32>
    %6 = arith.cmpf one, %4, %5 : vector<4x128xf32>
    %7 = arith.extui %6 : vector<4x128xi1> to vector<4x128xi32>
    %8 = arith.sitofp %7 : vector<4x128xi32> to vector<4x128xf32>
    %cst_4 = arith.constant 0.000000e+00 : f32
    %9 = vector.broadcast %cst_4 : f32 to vector<4x128xf32>
    %10 = arith.select %6, %3, %9 : vector<4x128xi1>, vector<4x128xf32>
    %cst_5 = arith.constant 0.000000e+00 : f32
    %11 = vector.broadcast %cst_5 : f32 to vector<4x128xf32>
    %12 = arith.select %6, %4, %11 : vector<4x128xi1>, vector<4x128xf32>
    %cst_6 = arith.constant 0.000000e+00 : f32
    %13 = vector.broadcast %cst_6 : f32 to vector<4x128xf32>
    %14 = arith.subf %13, %10 : vector<4x128xf32>
    %cst_7 = arith.constant 0.000000e+00 : f32
    %15 = vector.broadcast %cst_7 : f32 to vector<4x128xf32>
    %16 = arith.maximumf %14, %15 : vector<4x128xf32>
    %17 = math.absf %10 : vector<4x128xf32>
    %cst_8 = arith.constant 0.000000e+00 : f32
    %18 = vector.broadcast %cst_8 : f32 to vector<4x128xf32>
    %19 = arith.subf %18, %17 : vector<4x128xf32>
    %20 = math.exp %19 : vector<4x128xf32>
    %21 = math.log1p %20 : vector<4x128xf32>
    %22 = arith.addf %16, %21 : vector<4x128xf32>
    %23 = arith.mulf %12, %22 : vector<4x128xf32>
    %24 = arith.subf %8, %12 : vector<4x128xf32>
    %25 = arith.addf %10, %22 : vector<4x128xf32>
    %26 = arith.mulf %24, %25 : vector<4x128xf32>
    %c0_9 = arith.constant 0 : index
    %c0_10 = arith.constant 0 : index
    %27 = vector.load %arg4[%c0_9, %c0_10] : memref<8x128xf32, #tpu.memory_space<vmem>>, vector<1x128xf32>
    %cst_11 = arith.constant dense<0.000000e+00> : vector<128xf32>
    %28 = vector.multi_reduction <add>, %8, %cst_11 [0] : vector<4x128xf32> to vector<128xf32>
    %29 = vector.shape_cast %28 : vector<128xf32> to vector<1x128xf32>
    %30 = arith.addf %27, %29 : vector<1x128xf32>
    %c0_12 = arith.constant 0 : index
    %c0_13 = arith.constant 0 : index
    %31 = vector.load %arg4[%c0_12, %c0_13] : memref<8x128xf32, #tpu.memory_space<vmem>>, vector<1x128xf32>
    tpu.vector_store %arg4[%c0_12, %c0_13], %30 {strides = array<i32>} : memref<8x128xf32, #tpu.memory_space<vmem>>, vector<1x128xf32>,
    %c1 = arith.constant 1 : index
    %c0_14 = arith.constant 0 : index
    %32 = vector.load %arg4[%c1, %c0_14] : memref<8x128xf32, #tpu.memory_space<vmem>>, vector<1x128xf32>
    %cst_15 = arith.constant dense<0.000000e+00> : vector<128xf32>
    %33 = vector.multi_reduction <add>, %12, %cst_15 [0] : vector<4x128xf32> to vector<128xf32>
    %34 = vector.shape_cast %33 : vector<128xf32> to vector<1x128xf32>
    %35 = arith.addf %32, %34 : vector<1x128xf32>
    %c1_16 = arith.constant 1 : index
    %c0_17 = arith.constant 0 : index
    %36 = vector.load %arg4[%c1_16, %c0_17] : memref<8x128xf32, #tpu.memory_space<vmem>>, vector<1x128xf32>
    tpu.vector_store %arg4[%c1_16, %c0_17], %35 {strides = array<i32>} : memref<8x128xf32, #tpu.memory_space<vmem>>, vector<1x128xf32>,
    %c2 = arith.constant 2 : index
    %c0_18 = arith.constant 0 : index
    %37 = vector.load %arg4[%c2, %c0_18] : memref<8x128xf32, #tpu.memory_space<vmem>>, vector<1x128xf32>
    %cst_19 = arith.constant dense<0.000000e+00> : vector<128xf32>
    %38 = vector.multi_reduction <add>, %23, %cst_19 [0] : vector<4x128xf32> to vector<128xf32>
    %39 = vector.shape_cast %38 : vector<128xf32> to vector<1x128xf32>
    %40 = arith.addf %37, %39 : vector<1x128xf32>
    %c2_20 = arith.constant 2 : index
    %c0_21 = arith.constant 0 : index
    %41 = vector.load %arg4[%c2_20, %c0_21] : memref<8x128xf32, #tpu.memory_space<vmem>>, vector<1x128xf32>
    tpu.vector_store %arg4[%c2_20, %c0_21], %40 {strides = array<i32>} : memref<8x128xf32, #tpu.memory_space<vmem>>, vector<1x128xf32>,
    %c3 = arith.constant 3 : index
    %c0_22 = arith.constant 0 : index
    %42 = vector.load %arg4[%c3, %c0_22] : memref<8x128xf32, #tpu.memory_space<vmem>>, vector<1x128xf32>
    %cst_23 = arith.constant dense<0.000000e+00> : vector<128xf32>
    %43 = vector.multi_reduction <add>, %26, %cst_23 [0] : vector<4x128xf32> to vector<128xf32>
    %44 = vector.shape_cast %43 : vector<128xf32> to vector<1x128xf32>
    %45 = arith.addf %42, %44 : vector<1x128xf32>
    %c3_24 = arith.constant 3 : index
    %c0_25 = arith.constant 0 : index
    %46 = vector.load %arg4[%c3_24, %c0_25] : memref<8x128xf32, #tpu.memory_space<vmem>>, vector<1x128xf32>
    tpu.vector_store %arg4[%c3_24, %c0_25], %45 {strides = array<i32>} : memref<8x128xf32, #tpu.memory_space<vmem>>, vector<1x128xf32>,
    return
  }
  func.func @transform_0(%arg0: i32, %arg1: i32) -> (i32, i32) {
    %c1_i32 = arith.constant 1 : i32
    %0 = arith.muli %arg0, %c1_i32 : i32
    %1 = arith.addi %0, %arg1 : i32
    %c0_i32 = arith.constant 0 : i32
    %c0_i32_0 = arith.constant 0 : i32
    return %1, %c0_i32 : i32, i32
  }
  func.func @transform_1(%arg0: i32, %arg1: i32) -> (i32, i32) {
    %c1_i32 = arith.constant 1 : i32
    %0 = arith.muli %arg0, %c1_i32 : i32
    %1 = arith.addi %0, %arg1 : i32
    %c0_i32 = arith.constant 0 : i32
    %c0_i32_0 = arith.constant 0 : i32
    return %1, %c0_i32 : i32, i32
  }
  func.func @transform_2(%arg0: i32, %arg1: i32) -> (i32, i32) {
    %c0_i32 = arith.constant 0 : i32
    %c0_i32_0 = arith.constant 0 : i32
    return %arg0, %c0_i32 : i32, i32
  }
}

</mosaic_0001>

<llo_original>
// kernel: balanced_bce_loss.1
$region0: #{balanced_bce_loss.1}
  #allocation0 [shape = 'u32[]', space=smem, size = 0x4, offset = 0x4, fixed_abs, tag = 'smem constant byte address 0x4 - core index']
  #allocation1 [shape = 'u32[144,128]{1,0:T(1,128)}', space=vmem, size = 0x12000, scoped, tag = 'internal scratch']
  %s0 = inlined_call_operand.vmem [shape: f32[4,128], index: 0, kind: input, shape index: {}]
  %s1 = inlined_call_operand.vmem [shape: f32[4,128], index: 1, kind: input, shape index: {}]
  %s2 = inlined_call_operand.vmem [shape: f32[8,128], index: 2, kind: output, shape index: {}]
  %s3 = sld [smem:[#allocation0]]
  $region22: #{balanced_bce_loss.1} parent=0
    _
  %s5 = ssub.s32 1, %s3
  %s6 = scalar_select 0, %s5, %s3
  // Predicated region
  $region2: #{balanced_bce_loss.1} parent=0 // pred_check
    _
  $region3: #{balanced_bce_loss.1} parent=0 // pred_check_branch
    %8 = sbr.rel (0) target = $region5
  $region4: #{balanced_bce_loss.1} parent=0 // pred_region
    %s9 = sadd.s32 0, 0
    %p10 = scmp.lt.s32.totalorder %s9, 0
    %s11 = scalar_select %p10, %s9, 0
    %s12 = smul.addr %s11, 4
    %s13 = scalar_lea.vmem %s0, %s12
    %s14 = sadd.s32 0, 0
  $region5: #{balanced_bce_loss.1} parent=0 // pred_fallthru
    _
  // Predicated region
  $region6: #{balanced_bce_loss.1} parent=0 // pred_check
    _
  $region7: #{balanced_bce_loss.1} parent=0 // pred_check_branch
    %16 = sbr.rel (0) target = $region9
  $region8: #{balanced_bce_loss.1} parent=0 // pred_region
    %s17 = sadd.s32 0, 0
    %p18 = scmp.lt.s32.totalorder %s17, 0
    %s19 = scalar_select %p18, %s17, 0
    %s20 = smul.addr %s19, 4
    %s21 = scalar_lea.vmem %s1, %s20
    %s22 = sadd.s32 0, 0
  $region9: #{balanced_bce_loss.1} parent=0 // pred_fallthru
    _
  %s23 = sadd.s32 0, 0
  %p24 = scmp.lt.s32.totalorder %s23, 0
  %s25 = scalar_select %p24, %s23, 0
  %s26 = smul.addr %s25, 4
  %s27 = scalar_lea.vmem %s0, %s26
  %s28 = sadd.s32 0, 0
  %p29 = scmp.lt.s32.totalorder %s28, 0
  %s30 = scalar_select %p29, %s28, 0
  %s31 = smul.addr %s30, 4
  %s32 = scalar_lea.vmem %s1, %s31
  %s33 = sadd.s32 0, 0
  %p34 = scmp.lt.s32.totalorder %s33, 0
  %s35 = scalar_select %p34, %s33, 0
  %s36 = smul.addr %s35, 4
  %s37 = scalar_lea.vmem %s0, %s36
  %s38 = sadd.s32 0, 0
  %s39 = sadd.s32 0, 0
  %p40 = scmp.lt.s32.totalorder %s39, 0
  %s41 = scalar_select %p40, %s39, 0
  %s42 = smul.addr %s41, 4
  %s43 = scalar_lea.vmem %s1, %s42
  %s44 = sadd.s32 0, 0
  %p45 = scmp.eq.s32.totalorder 0, 0
  // Predicated region
  $region10: #{balanced_bce_loss.1} parent=0 // pred_check
    %p46 = pneg %p45
  $region11: #{balanced_bce_loss.1} parent=0 // pred_check_branch
    %48 = sbr.rel (%p46) target = $region13
  $region12: #{balanced_bce_loss.1} parent=0 // pred_region
    %49 = vst [vmem:[%s2] sm:$0xff] 0.0
  $region13: #{balanced_bce_loss.1} parent=0 // pred_fallthru
    _
  %v50 = vld [vmem:[%s37] sm:$0xf]
  %v51 = vld [vmem:[%s43] sm:$0xf]
  %vm52 = vcmp.ne.f32.partialorder %v51, 255.0
  %v53 = vsel %vm52, 1, 0
  %v54 = vcvt.s32.f32 %v53
  %v55 = vsel %vm52, %v50, 0.0
  %v56 = vsel %vm52, %v51, 0.0
  %v57 = vsub.f32 0.0, %v55
  %v58 = vmax.f32 %v57, 0.0
  %v59 = vand.u32 2147483647, %v55
  %v60 = vsub.f32 0.0, %v59
  %v61 = vmul.f32 %v60, 1.442695
  %v62 = vpow.pop %v61
  %v63 = vadd.f32 %v62, 1.0
  %v64 = vlog2.pop %v63
  %v65 = vmul.f32 %v64, 0.6931472
  %v66 = vmul.f32 -0.5, %v62
  %v67 = vadd.f32 %v66, 1.0
  %v68 = vmul.f32 %v67, %v62
  %v69 = vand.u32 2147483647, %v62
  %vm70 = vcmp.lt.f32.partialorder %v69, 0.0004427343
  %v71 = vsel %vm70, %v68, %v65
  %v72 = vadd.f32 %v58, %v71
  %v73 = vmul.f32 %v56, %v72
  %v74 = vsub.f32 %v54, %v56
  %v75 = vadd.f32 %v55, %v72
  %v76 = vmul.f32 %v74, %v75
  %v77 = vld [vmem:[%s2] sm:$0x1]
  %vm78 = vcmask 1043456
  %v79 = vsel %vm78, %v54, 0.0
  %v80 = vrot.slane %v79, 4
  %v81 = vadd.f32 %v79, %v80
  %v82 = vrot.slane %v81, 2
  %v83 = vadd.f32 %v81, %v82
  %v84 = vrot.slane %v83, 1
  %v85 = vadd.f32 %v83, %v84
  %v86 = vadd.f32 %v77, %v85
  %87 = vst [vmem:[%s2] sm:$0x1] %v86
  %v88 = vld [vmem:[%s2 + $0x1] sm:$0x1]
  %v89 = vsel %vm78, %v56, 0.0
  %v90 = vrot.slane %v89, 4
  %v91 = vadd.f32 %v89, %v90
  %v92 = vrot.slane %v91, 2
  %v93 = vadd.f32 %v91, %v92
  %v94 = vrot.slane %v93, 1
  %v95 = vadd.f32 %v93, %v94
  %v96 = vadd.f32 %v88, %v95
  %97 = vst [vmem:[%s2 + $0x1] sm:$0x1] %v96
  %v98 = vld [vmem:[%s2 + $0x2] sm:$0x1]
  %v99 = vsel %vm78, %v73, 0.0
  %v100 = vrot.slane %v99, 4
  %v101 = vadd.f32 %v99, %v100
  %v102 = vrot.slane %v101, 2
  %v103 = vadd.f32 %v101, %v102
  %v104 = vrot.slane %v103, 1
  %v105 = vadd.f32 %v103, %v104
  %v106 = vadd.f32 %v98, %v105
  %107 = vst [vmem:[%s2 + $0x2] sm:$0x1] %v106
  %v108 = vld [vmem:[%s2 + $0x3] sm:$0x1]
  %v109 = vsel %vm78, %v76, 0.0
  %v110 = vrot.slane %v109, 4
  %v111 = vadd.f32 %v109, %v110
  %v112 = vrot.slane %v111, 2
  %v113 = vadd.f32 %v111, %v112
  %v114 = vrot.slane %v113, 1
  %v115 = vadd.f32 %v113, %v114
  %v116 = vadd.f32 %v108, %v115
  %117 = vst [vmem:[%s2 + $0x3] sm:$0x1] %v116
  // Predicated region
  $region14: #{balanced_bce_loss.1} parent=0 // pred_check
    _
  $region15: #{balanced_bce_loss.1} parent=0 // pred_check_branch
    %119 = sbr.rel (0) target = $region17
  $region16: #{balanced_bce_loss.1} parent=0 // pred_region
    _
  $region17: #{balanced_bce_loss.1} parent=0 // pred_fallthru
    _
  // Predicated region
  $region18: #{balanced_bce_loss.1} parent=0 // pred_check
    _
  $region19: #{balanced_bce_loss.1} parent=0 // pred_check_branch
    %121 = sbr.rel (0) target = $region21
  $region20: #{balanced_bce_loss.1} parent=0 // pred_region
    _
  $region21: #{balanced_bce_loss.1} parent=0 // pred_fallthru
    _

</llo_original>
